<compile_context>
chip_gen: v7x
topology: tpu7x:2x2x1
jax: 0.10.0
libtpu: 0.0.40
codegen_flags: <defaults>
</compile_context>

<pallas_src>
import jax
import jax.numpy as jnp
from jax.experimental import pallas as pl
from jax.experimental.pallas import tpu as pltpu


def _round_up(v: int, m: int) -> int:
    return ((v + m - 1) // m) * m


def _cdiv(a: int, b: int) -> int:
    return (a + b - 1) // b


def gcn_kernel(a_ref, xs_ref, dinv_ref, w_ref, b_ref, o_ref):
    """Grid = (row tiles i : parallel, reduction tiles k : arbitrary).

    a_ref   : [tm, tk]      int8  A_tilde tile (values {0,1,2})
    xs_ref  : [n_cols, cd]  bf16  (D^{-1/2} X), fully VMEM-resident
    dinv_ref: [tm, 1]       f32   D^{-1/2} for this row tile
    w_ref   : [cd, cd]      f32   padded weight (full, resident)
    b_ref   : [1, cd]       f32   padded bias   (full, resident)
    o_ref   : [tm, cd]      f32   output tile; doubles as A@Xs accumulator
                                  (resident across k -> no separate scratch)
    """
    k = pl.program_id(1)
    tk = a_ref.shape[1]

    @pl.when(k == 0)
    def _init():
        o_ref[...] = jnp.zeros_like(o_ref)

    # Neighborhood aggregation on the MXU: int8 -> bf16 upcast is VPU work
    # hidden under the A DMA; bf16 multiply, f32 accumulate into the resident
    # output block.
    a_tile = a_ref[...].astype(jnp.bfloat16)
    xs_tile = xs_ref[pl.ds(pl.multiple_of(k * tk, tk), tk), :]
    o_ref[...] += jnp.dot(a_tile, xs_tile, preferred_element_type=jnp.float32)

    @pl.when(k == pl.num_programs(1) - 1)
    def _finalize():
        # Row-wise D^{-1/2} post-scale, then one small feature-transform matmul
        # per row tile (kept in f32 so no extra bf16 rounding), + bias.
        ax = dinv_ref[...] * o_ref[...]
        o_ref[...] = jnp.dot(ax, w_ref[...],
                             preferred_element_type=jnp.float32) + b_ref[...]


def gcn_conv_pallas(x, edge_index, weight, bias, *, improved=True,
                    tm=1024, tk=1024):
    """x: [N, C_in] f32, edge_index: [2, E] int (row 0 = src, row 1 = dst),
    weight: [C_in, C_out] f32, bias: [C_out] f32. Returns [N, C_out] f32."""
    N, c_in = x.shape
    c_out = weight.shape[1]
    fill = 2 if improved else 1
    LANE = 128

    # ---- tile / padding selection (rows and cols padded independently) -----
    if N <= 256:
        tm_eff = _round_up(N, LANE)                    # single tiny row tile
    else:
        # at least 2 row tiles so v7x's two TensorCores both get work
        tm_eff = min(tm, _round_up(_cdiv(N, 2), LANE))
    tk_eff = _round_up(N, LANE) if N <= tk else tk
    n_rows = _round_up(N, tm_eff)
    n_cols = _round_up(N, tk_eff)
    # One shared padded feature dim (zero-padded columns/rows are inert).
    cdim = max(_round_up(c_in, LANE), _round_up(c_out, LANE))

    # ---- glue (O(E) + one int8 N^2 scatter; no dense f32 A, no dense row-sum)
    src, dst = edge_index[0], edge_index[1]
    E = src.shape[0]

    # Row-sum of A_tilde = (# in-edges at dst) + fill  -> O(E) segment sum.
    deg = jnp.zeros((N,), jnp.float32).at[dst].add(1.0) + float(fill)
    dinv = jnp.where(deg > 0, jax.lax.rsqrt(deg), 0.0)

    # Build A_tilde directly in its storage dtype (int8) and padded shape,
    # self-loops folded into the same scatter.
    diag = jnp.arange(N, dtype=src.dtype)
    rows = jnp.concatenate([dst, diag])
    cols = jnp.concatenate([src, diag])
    vals = jnp.concatenate([jnp.ones((E,), jnp.int8),
                            jnp.full((N,), fill, jnp.int8)])
    a_p = jnp.zeros((n_rows, n_cols), jnp.int8).at[rows, cols].add(vals)

    # Pre-fold the column-side D^{-1/2} into X (O(N*C_in)).
    xs = (dinv[:, None] * x).astype(jnp.bfloat16)
    xs_p = jnp.zeros((n_cols, cdim), jnp.bfloat16).at[:N, :c_in].set(xs)
    dinv_p = jnp.zeros((n_rows, 1), jnp.float32).at[:N, 0].set(dinv)
    w_p = jnp.zeros((cdim, cdim), jnp.float32).at[:c_in, :c_out].set(
        weight.astype(jnp.float32))
    b_p = jnp.zeros((1, cdim), jnp.float32).at[0, :c_out].set(
        bias.astype(jnp.float32))

    grid = (n_rows // tm_eff, n_cols // tk_eff)   # (rows: parallel, k: arbitrary)

    flops = 2 * n_rows * n_cols * cdim + 2 * n_rows * cdim * cdim
    bytes_accessed = (
        n_rows * n_cols                         # int8 A_tilde
        + 2 * n_cols * cdim                     # bf16 Xs (resident, read once)
        + 4 * (cdim * cdim + n_rows + cdim)     # f32 W, dinv, bias
        + 4 * n_rows * cdim                     # f32 output
    )

    out_p = pl.pallas_call(
        gcn_kernel,
        out_shape=jax.ShapeDtypeStruct((n_rows, cdim), jnp.float32),
        grid_spec=pltpu.PrefetchScalarGridSpec(
            num_scalar_prefetch=0,
            grid=grid,
            in_specs=[
                pl.BlockSpec((tm_eff, tk_eff), lambda i, k: (i, k)),  # A tile
                pl.BlockSpec((n_cols, cdim), lambda i, k: (0, 0)),    # Xs resident
                pl.BlockSpec((tm_eff, 1), lambda i, k: (i, 0)),       # dinv rows
                pl.BlockSpec((cdim, cdim), lambda i, k: (0, 0)),      # weight
                pl.BlockSpec((1, cdim), lambda i, k: (0, 0)),         # bias
            ],
            out_specs=pl.BlockSpec((tm_eff, cdim), lambda i, k: (i, 0)),
        ),
        compiler_params=pltpu.CompilerParams(
            dimension_semantics=("parallel", "arbitrary"),
            vmem_limit_bytes=40 * 1024 * 1024,   # fits v7x's 64 MiB VMEM
        ),
        cost_estimate=pl.CostEstimate(
            flops=flops, transcendentals=0, bytes_accessed=bytes_accessed),
    )(a_p, xs_p, dinv_p, w_p, b_p)

    # Slice padding off (rows beyond N and lanes beyond C_out).
    return out_p[:N, :c_out]


def reference_gcn(x, edge_index, weight, bias, *, improved=True):
    """Pure-JAX f32 reference of GCNConv forward (for sanity check)."""
    N = x.shape[0]
    fill = 2.0 if improved else 1.0
    a = jnp.zeros((N, N), dtype=jnp.float32).at[edge_index[1], edge_index[0]].add(1.0)
    a = a + fill * jnp.eye(N, dtype=jnp.float32)
    deg = jnp.sum(a, axis=1)
    dinv = jnp.where(deg > 0, jax.lax.rsqrt(deg), 0.0)
    a_hat = dinv[:, None] * a * dinv[None, :]
    return a_hat @ (x @ weight) + bias[None, :]


if __name__ == "__main__":
    key = jax.random.PRNGKey(0)
    k_x, k_w, k_b = jax.random.split(key, 3)

    in_channels, out_channels = 16, 32
    num_nodes = 16

    # Node features [N, C_in]
    x = jax.random.normal(k_x, (num_nodes, in_channels), dtype=jnp.float32)

    # Deterministic ring graph, both directions: edge_index [2, 2N]
    idx = jnp.arange(num_nodes, dtype=jnp.int32)
    src = jnp.concatenate([idx, (idx + 1) % num_nodes])
    dst = jnp.concatenate([(idx + 1) % num_nodes, idx])
    edge_index = jnp.stack([src, dst], axis=0)

    # GCNConv lin weight kept pre-transposed to [in, out], plus bias [out].
    w = jax.random.normal(k_w, (in_channels, out_channels), dtype=jnp.float32) * 0.1
    b = jax.random.normal(k_b, (out_channels,), dtype=jnp.float32) * 0.1

    out = gcn_conv_pallas(x, edge_index, w, b, improved=True)
    out = jax.block_until_ready(out)

    ref = reference_gcn(x, edge_index, w, b, improved=True)
    assert out.shape == (num_nodes, out_channels)
    # int8 A is exact, Xs is bf16, everything downstream f32 -> tight-ish tol.
    max_err = float(jnp.max(jnp.abs(out - ref)))
    assert jnp.allclose(out, ref, atol=2e-2, rtol=2e-2), (
        f"mismatch vs reference, max abs err {max_err}")

    print("KERNEL_OK")
</pallas_src>

<mosaic_0001>
module attributes {stable_mosaic.version = 11 : i64} {
  func.func @gcn_kernel(%arg0: i32, %arg1: i32, %arg2: memref<128x128xi8, #tpu.memory_space<vmem>>, %arg3: memref<128x128xbf16, #tpu.memory_space<vmem>>, %arg4: memref<128x1xf32, #tpu.memory_space<vmem>>, %arg5: memref<128x128xf32, #tpu.memory_space<vmem>>, %arg6: memref<1x128xf32, #tpu.memory_space<vmem>>, %arg7: memref<128x128xf32, #tpu.memory_space<vmem>>) attributes {dimension_semantics = [#tpu.dimension_semantics<parallel>, #tpu.dimension_semantics<arbitrary>], iteration_bounds = array<i64: 1, 1>, scalar_prefetch = 0 : i64, scratch_operands = 0 : i64, tpu.core_type = #tpu.core_type<tc>, window_params = [{transform_indices = @transform_0, window_bounds = array<i64: 128, 128>}, {pipeline_mode = #tpu.pipeline_mode<synchronous>, transform_indices = @transform_1, window_bounds = array<i64: 128, 128>}, {transform_indices = @transform_2, window_bounds = array<i64: 128, 1>}, {pipeline_mode = #tpu.pipeline_mode<synchronous>, transform_indices = @transform_3, window_bounds = array<i64: 128, 128>}, {pipeline_mode = #tpu.pipeline_mode<synchronous>, transform_indices = @transform_4, window_bounds = array<i64: 1, 128>}, {transform_indices = @transform_5, window_bounds = array<i64: 128, 128>}]} {
    %c0_i32 = arith.constant 0 : i32
    %0 = arith.cmpi eq, %arg1, %c0_i32 : i32
    %1 = arith.extui %0 : i1 to i32
    %c0_i32_0 = arith.constant 0 : i32
    %2 = arith.cmpi ne, %1, %c0_i32_0 : i32
    scf.if %2 {
      %cst_9 = arith.constant 0.000000e+00 : f32
      %16 = vector.broadcast %cst_9 : f32 to vector<128x128xf32>
      %c0_10 = arith.constant 0 : index
      %c0_11 = arith.constant 0 : index
      %17 = vector.load %arg7[%c0_10, %c0_11] : memref<128x128xf32, #tpu.memory_space<vmem>>, vector<128x128xf32>
      tpu.vector_store %arg7[%c0_10, %c0_11], %16 {strides = array<i32>} : memref<128x128xf32, #tpu.memory_space<vmem>>, vector<128x128xf32>,
    } else {
    }
    %c0 = arith.constant 0 : index
    %c0_1 = arith.constant 0 : index
    %3 = vector.load %arg2[%c0, %c0_1] : memref<128x128xi8, #tpu.memory_space<vmem>>, vector<128x128xi8>
    %4 = arith.sitofp %3 : vector<128x128xi8> to vector<128x128xbf16>
    %c128_i32 = arith.constant 128 : i32
    %5 = arith.muli %arg1, %c128_i32 : i32
    %6 = tpu.assume_multiple %5, 128 : i32
    %7 = arith.index_cast %6 : i32 to index
    %c0_2 = arith.constant 0 : index
    %8 = vector.load %arg3[%7, %c0_2] : memref<128x128xbf16, #tpu.memory_space<vmem>>, vector<128x128xbf16>
    %c0_3 = arith.constant 0 : index
    %c0_4 = arith.constant 0 : index
    %9 = vector.load %arg7[%c0_3, %c0_4] : memref<128x128xf32, #tpu.memory_space<vmem>>, vector<128x128xf32>
    %cst = arith.constant dense<0.000000e+00> : vector<128x128xf32>
    %10 = tpu.matmul %4, %8, %cst {dimension_numbers = #tpu.dot_dimension_numbers<[1], [0], [0], [1], [0, 0, 1, 1], [], []>} : vector<128x128xbf16>, vector<128x128xbf16>, vector<128x128xf32> -> vector<128x128xf32>
    %11 = arith.addf %9, %10 : vector<128x128xf32>
    %c0_5 = arith.constant 0 : index
    %c0_6 = arith.constant 0 : index
    %12 = vector.load %arg7[%c0_5, %c0_6] : memref<128x128xf32, #tpu.memory_space<vmem>>, vector<128x128xf32>
    tpu.vector_store %arg7[%c0_5, %c0_6], %11 {strides = array<i32>} : memref<128x128xf32, #tpu.memory_space<vmem>>, vector<128x128xf32>,
    %c0_i32_7 = arith.constant 0 : i32
    %13 = arith.cmpi eq, %arg1, %c0_i32_7 : i32
    %14 = arith.extui %13 : i1 to i32
    %c0_i32_8 = arith.constant 0 : i32
    %15 = arith.cmpi ne, %14, %c0_i32_8 : i32
    scf.if %15 {
      %c0_9 = arith.constant 0 : index
      %c0_10 = arith.constant 0 : index
      %16 = vector.load %arg4[%c0_9, %c0_10] : memref<128x1xf32, #tpu.memory_space<vmem>>, vector<128x1xf32>
      %c0_11 = arith.constant 0 : index
      %c0_12 = arith.constant 0 : index
      %17 = vector.load %arg7[%c0_11, %c0_12] : memref<128x128xf32, #tpu.memory_space<vmem>>, vector<128x128xf32>
      %18 = vector.broadcast %16 : vector<128x1xf32> to vector<128x128xf32>
      %19 = arith.mulf %18, %17 : vector<128x128xf32>
      %c0_13 = arith.constant 0 : index
      %c0_14 = arith.constant 0 : index
      %20 = vector.load %arg5[%c0_13, %c0_14] : memref<128x128xf32, #tpu.memory_space<vmem>>, vector<128x128xf32>
      %cst_15 = arith.constant dense<0.000000e+00> : vector<128x128xf32>
      %21 = tpu.matmul %19, %20, %cst_15 {dimension_numbers = #tpu.dot_dimension_numbers<[1], [0], [0], [1], [0, 0, 1, 1], [], []>} : vector<128x128xf32>, vector<128x128xf32>, vector<128x128xf32> -> vector<128x128xf32>
      %c0_16 = arith.constant 0 : index
      %c0_17 = arith.constant 0 : index
      %22 = vector.load %arg6[%c0_16, %c0_17] : memref<1x128xf32, #tpu.memory_space<vmem>>, vector<1x128xf32>
      %23 = vector.broadcast %22 : vector<1x128xf32> to vector<128x128xf32>
      %24 = arith.addf %21, %23 : vector<128x128xf32>
      %c0_18 = arith.constant 0 : index
      %c0_19 = arith.constant 0 : index
      %25 = vector.load %arg7[%c0_18, %c0_19] : memref<128x128xf32, #tpu.memory_space<vmem>>, vector<128x128xf32>
      tpu.vector_store %arg7[%c0_18, %c0_19], %24 {strides = array<i32>} : memref<128x128xf32, #tpu.memory_space<vmem>>, vector<128x128xf32>,
    } else {
    }
    return
  }
  func.func @transform_0(%arg0: i32, %arg1: i32) -> (i32, i32) {
    %c0_i32 = arith.constant 0 : i32
    return %arg0, %arg1 : i32, i32
  }
  func.func @transform_1(%arg0: i32, %arg1: i32) -> (i32, i32) {
    %c0_i32 = arith.constant 0 : i32
    %c0_i32_0 = arith.constant 0 : i32
    %c0_i32_1 = arith.constant 0 : i32
    return %c0_i32, %c0_i32_0 : i32, i32
  }
  func.func @transform_2(%arg0: i32, %arg1: i32) -> (i32, i32) {
    %c0_i32 = arith.constant 0 : i32
    %c0_i32_0 = arith.constant 0 : i32
    return %arg0, %c0_i32 : i32, i32
  }
  func.func @transform_3(%arg0: i32, %arg1: i32) -> (i32, i32) {
    %c0_i32 = arith.constant 0 : i32
    %c0_i32_0 = arith.constant 0 : i32
    %c0_i32_1 = arith.constant 0 : i32
    return %c0_i32, %c0_i32_0 : i32, i32
  }
  func.func @transform_4(%arg0: i32, %arg1: i32) -> (i32, i32) {
    %c0_i32 = arith.constant 0 : i32
    %c0_i32_0 = arith.constant 0 : i32
    %c0_i32_1 = arith.constant 0 : i32
    return %c0_i32, %c0_i32_0 : i32, i32
  }
  func.func @transform_5(%arg0: i32, %arg1: i32) -> (i32, i32) {
    %c0_i32 = arith.constant 0 : i32
    %c0_i32_0 = arith.constant 0 : i32
    return %arg0, %c0_i32 : i32, i32
  }
}

</mosaic_0001>

<llo_original>
// kernel: tpu_custom_call.1
$region0: #{tpu_custom_call.1}
  #allocation0 [shape = 'u32[]', space=smem, size = 0x4, offset = 0x4, fixed_abs, tag = 'smem constant byte address 0x4 - core index']
  #allocation1 [shape = 'u32[144,128]{1,0:T(1,128)}', space=vmem, size = 0x12000, scoped, tag = 'internal scratch']
  %s0 = inlined_call_operand.hbm [shape: s8[128,128], index: 0, kind: input, shape index: {}]
  %s1 = inlined_call_operand.hbm [shape: bf16[128,128], index: 1, kind: input, shape index: {}]
  %s2 = inlined_call_operand.vmem [shape: f32[128,1], index: 2, kind: input, shape index: {}]
  %s3 = inlined_call_operand.vmem [shape: f32[128,128], index: 3, kind: input, shape index: {}]
  %s4 = inlined_call_operand.vmem [shape: f32[1,128], index: 4, kind: input, shape index: {}]
  %s5 = inlined_call_operand.hbm [shape: f32[128,128], index: 5, kind: output, shape index: {}]
  %s6 = sld [smem:[#allocation0]]
  $region46: #{tpu_custom_call.1} parent=0
    _
  %s8 = ssub.s32 1, %s6
  %s9 = scalar_select 0, %s8, %s6
  $region1: #{tpu_custom_call.1} parent=0
    #allocation2 [shape = 'u8[16384]{0}', space=vmem, size = 0x4000, scoped, tag = 'input window, operand 0, single buffered']
    #allocation3 [shape = 's32[1]{0}', space=sflag, size = 0x4, scoped, tag = 'scoped memory for tpu_custom_call.1']
    #allocation4 [shape = 's32[1]{0}', space=sflag, size = 0x4, scoped, tag = 'scoped memory for tpu_custom_call.1']
    #allocation5 [shape = 'u8[32768]{0}', space=vmem, size = 0x8000, scoped, tag = 'input window, operand 1, single buffered']
    #allocation6 [shape = 's32[1]{0}', space=sflag, size = 0x4, scoped, tag = 'scoped memory for tpu_custom_call.1']
    #allocation7 [shape = 'u8[65536]{0}', space=vmem, size = 0x10000, scoped, tag = 'output window, operand 0, single buffered']
    %10 = vsyncpa [#allocation3], 0
    %11 = vsyncpa [#allocation6], 0
    %12 = vsyncpa [#allocation4], 0
    // Predicated region
    $region2: #{tpu_custom_call.1} parent=1 // pred_check
      _
    $region3: #{tpu_custom_call.1} parent=1 // pred_check_branch
      %14 = sbr.rel (0) target = $region5
    $region4: #{tpu_custom_call.1} parent=1 // pred_region
      %s16 = ssub.s32 512, 512
      %17 = vsyncadd [#allocation3], %s16
      %s18 = sshll.u32 [#allocation2], 4
      %s19 = int_to_ptr.vmem [resolvable:$true] %s18
      %24 = dma.hbm_to_vmem [thread:$0]  %s0, 512, %s19, [#allocation3], 128, 128, 8
    $region5: #{tpu_custom_call.1} parent=1 // pred_fallthru
      _
    // Predicated region
    $region6: #{tpu_custom_call.1} parent=1 // pred_check
      _
    $region7: #{tpu_custom_call.1} parent=1 // pred_check_branch
      %26 = sbr.rel (0) target = $region9
    $region8: #{tpu_custom_call.1} parent=1 // pred_region
      %s28 = ssub.s32 1024, 1024
      %29 = vsyncadd [#allocation6], %s28
      %s30 = sshll.u32 [#allocation5], 4
      %s31 = int_to_ptr.vmem [resolvable:$true] %s30
      %36 = dma.hbm_to_vmem [thread:$0]  %s1, 1024, %s31, [#allocation6], 64, 64, 4
    $region9: #{tpu_custom_call.1} parent=1 // pred_fallthru
      _
    // Predicated region
    $region10: #{tpu_custom_call.1} parent=1 // pred_check
      _
    $region11: #{tpu_custom_call.1} parent=1 // pred_check_branch
      %38 = sbr.rel (0) target = $region13
    $region12: #{tpu_custom_call.1} parent=1 // pred_region
      _
    $region13: #{tpu_custom_call.1} parent=1 // pred_fallthru
      _
    // Predicated region
    $region14: #{tpu_custom_call.1} parent=1 // pred_check
      _
    $region15: #{tpu_custom_call.1} parent=1 // pred_check_branch
      %40 = sbr.rel (0) target = $region17
    $region16: #{tpu_custom_call.1} parent=1 // pred_region
      _
    $region17: #{tpu_custom_call.1} parent=1 // pred_fallthru
      _
    // Predicated region
    $region18: #{tpu_custom_call.1} parent=1 // pred_check
      _
    $region19: #{tpu_custom_call.1} parent=1 // pred_check_branch
      %42 = sbr.rel (0) target = $region21
    $region20: #{tpu_custom_call.1} parent=1 // pred_region
      _
    $region21: #{tpu_custom_call.1} parent=1 // pred_fallthru
      _
    // Predicated region
    $region22: #{tpu_custom_call.1} parent=1 // pred_check
      _
    $region23: #{tpu_custom_call.1} parent=1 // pred_check_branch
      %44 = sbr.rel (0) target = $region25
    $region24: #{tpu_custom_call.1} parent=1 // pred_region
      %45 = dma.done [#allocation3], 512
    $region25: #{tpu_custom_call.1} parent=1 // pred_fallthru
      _
    // Predicated region
    $region26: #{tpu_custom_call.1} parent=1 // pred_check
      _
    $region27: #{tpu_custom_call.1} parent=1 // pred_check_branch
      %47 = sbr.rel (0) target = $region29
    $region28: #{tpu_custom_call.1} parent=1 // pred_region
      %48 = dma.done [#allocation6], 1024
    $region29: #{tpu_custom_call.1} parent=1 // pred_fallthru
      _
    %p50 = scmp.eq.s32.totalorder 0, 0
    // Predicated region
    $region30: #{tpu_custom_call.1} parent=1 // pred_check
      %p51 = pneg %p50
    $region31: #{tpu_custom_call.1} parent=1 // pred_check_branch
      %53 = sbr.rel (%p51) target = $region33
    $region32: #{tpu_custom_call.1} parent=1 // pred_region
      %54 = vst [vmem:[#allocation7] sm:$0xff] 0.0
      %55 = vst [vmem:[#allocation7 + $0x8] sm:$0xff] 0.0
      %56 = vst [vmem:[#allocation7 + $0x10] sm:$0xff] 0.0
      %57 = vst [vmem:[#allocation7 + $0x18] sm:$0xff] 0.0
      %58 = vst [vmem:[#allocation7 + $0x20] sm:$0xff] 0.0
      %59 = vst [vmem:[#allocation7 + $0x28] sm:$0xff] 0.0
      %60 = vst [vmem:[#allocation7 + $0x30] sm:$0xff] 0.0
      %61 = vst [vmem:[#allocation7 + $0x38] sm:$0xff] 0.0
      %62 = vst [vmem:[#allocation7 + $0x40] sm:$0xff] 0.0
      %63 = vst [vmem:[#allocation7 + $0x48] sm:$0xff] 0.0
      %64 = vst [vmem:[#allocation7 + $0x50] sm:$0xff] 0.0
      %65 = vst [vmem:[#allocation7 + $0x58] sm:$0xff] 0.0
      %66 = vst [vmem:[#allocation7 + $0x60] sm:$0xff] 0.0
      %67 = vst [vmem:[#allocation7 + $0x68] sm:$0xff] 0.0
      %68 = vst [vmem:[#allocation7 + $0x70] sm:$0xff] 0.0
      %69 = vst [vmem:[#allocation7 + $0x78] sm:$0xff] 0.0
    $region33: #{tpu_custom_call.1} parent=1 // pred_fallthru
      _
    %v70 = vld [vmem:[#allocation2] sm:$0xff]
    %v71 = vld [vmem:[#allocation2 + $0x8] sm:$0xff]
    %v72 = vld [vmem:[#allocation2 + $0x10] sm:$0xff]
    %v73 = vld [vmem:[#allocation2 + $0x18] sm:$0xff]
    %v74 = vunpack.c.l.s8.bf16 %v70
    %v75 = vunpack.c.h.s8.bf16 %v70
    %v76 = vunpack.c.l.s8.bf16 %v71
    %v77 = vunpack.c.h.s8.bf16 %v71
    %v78 = vunpack.c.l.s8.bf16 %v72
    %v79 = vunpack.c.h.s8.bf16 %v72
    %v80 = vunpack.c.l.s8.bf16 %v73
    %v81 = vunpack.c.h.s8.bf16 %v73
    %s82 = smul.u32 0, 128
    %s83 = sshra.s32 %s82, 3
    %s84 = sand.u32 %s82, 7
    %s85 = smul.addr %s83, 4
    %s86 = scalar_lea.vmem [#allocation5], %s85
    %v87 = vld [vmem:[%s86] sm:$0xf]
    %v88 = vld [vmem:[%s86 + $0x4] sm:$0xf]
    %v89 = vld [vmem:[%s86 + $0x8] sm:$0xf]
    %v90 = vld [vmem:[%s86 + $0xc] sm:$0xf]
    %v91 = vld [vmem:[%s86 + $0x10] sm:$0xf]
    %v92 = vld [vmem:[%s86 + $0x14] sm:$0xf]
    %v93 = vld [vmem:[%s86 + $0x18] sm:$0xf]
    %v94 = vld [vmem:[%s86 + $0x1c] sm:$0xf]
    %v95 = vld [vmem:[%s86 + $0x20] sm:$0xf]
    %v96 = vld [vmem:[%s86 + $0x24] sm:$0xf]
    %v97 = vld [vmem:[%s86 + $0x28] sm:$0xf]
    %v98 = vld [vmem:[%s86 + $0x2c] sm:$0xf]
    %v99 = vld [vmem:[%s86 + $0x30] sm:$0xf]
    %v100 = vld [vmem:[%s86 + $0x34] sm:$0xf]
    %v101 = vld [vmem:[%s86 + $0x38] sm:$0xf]
    %v102 = vld [vmem:[%s86 + $0x3c] sm:$0xf]
    %v103 = vld [vmem:[#allocation7] sm:$0xff]
    %v104 = vld [vmem:[#allocation7 + $0x8] sm:$0xff]
    %v105 = vld [vmem:[#allocation7 + $0x10] sm:$0xff]
    %v106 = vld [vmem:[#allocation7 + $0x18] sm:$0xff]
    %v107 = vld [vmem:[#allocation7 + $0x20] sm:$0xff]
    %v108 = vld [vmem:[#allocation7 + $0x28] sm:$0xff]
    %v109 = vld [vmem:[#allocation7 + $0x30] sm:$0xff]
    %v110 = vld [vmem:[#allocation7 + $0x38] sm:$0xff]
    %v111 = vld [vmem:[#allocation7 + $0x40] sm:$0xff]
    %v112 = vld [vmem:[#allocation7 + $0x48] sm:$0xff]
    %v113 = vld [vmem:[#allocation7 + $0x50] sm:$0xff]
    %v114 = vld [vmem:[#allocation7 + $0x58] sm:$0xff]
    %v115 = vld [vmem:[#allocation7 + $0x60] sm:$0xff]
    %v116 = vld [vmem:[#allocation7 + $0x68] sm:$0xff]
    %v117 = vld [vmem:[#allocation7 + $0x70] sm:$0xff]
    %v118 = vld [vmem:[#allocation7 + $0x78] sm:$0xff]
    %v135 = vunpack.c.l.b16 %v87
    %v136 = vunpack.c.l.b16 %v88
    %v137 = vunpack.c.l.b16 %v89
    %v138 = vunpack.c.l.b16 %v90
    %v139 = vunpack.c.l.b16 %v91
    %v140 = vunpack.c.l.b16 %v92
    %v141 = vunpack.c.l.b16 %v93
    %v142 = vunpack.c.l.b16 %v94
    %v143 = vunpack.c.l.b16 %v95
    %v144 = vunpack.c.l.b16 %v96
    %v145 = vunpack.c.l.b16 %v97
    %v146 = vunpack.c.l.b16 %v98
    %v147 = vunpack.c.l.b16 %v99
    %v148 = vunpack.c.l.b16 %v100
    %v149 = vunpack.c.l.b16 %v101
    %v150 = vunpack.c.l.b16 %v102
    %v151 = vpack.c.b16 %v136, %v135
    %v152 = vpack.c.b16 %v138, %v137
    %v153 = vpack.c.b16 %v140, %v139
    %v154 = vpack.c.b16 %v142, %v141
    %v155 = vpack.c.b16 %v144, %v143
    %v156 = vpack.c.b16 %v146, %v145
    %v157 = vpack.c.b16 %v148, %v147
    %v158 = vpack.c.b16 %v150, %v149
    %167 = vmatprep.subr.bf16.mxu0 0
    %168 = vmatpush1.bf16.msra.mxu0 %v151
    %169 = vmatprep.subr.bf16.mxu0 0
    %170 = vmatpush1.bf16.msra.mxu0 %v152
    %171 = vmatprep.subr.bf16.mxu0 0
    %172 = vmatpush1.bf16.msra.mxu0 %v153
    %173 = vmatprep.subr.bf16.mxu0 0
    %174 = vmatpush1.bf16.msra.mxu0 %v154
    %175 = vmatprep.subr.bf16.mxu0 0
    %176 = vmatpush1.bf16.msra.mxu0 %v155
    %177 = vmatprep.subr.bf16.mxu0 0
    %178 = vmatpush1.bf16.msra.mxu0 %v156
    %179 = vmatprep.subr.bf16.mxu0 0
    %180 = vmatpush1.bf16.msra.mxu0 %v157
    %181 = vmatprep.subr.bf16.mxu0 0
    %182 = vmatpush1.bf16.msra.mxu0 %v158
    %183 = vmatprep.subr.bf16.mxu0 0
    %184 = vmatpush1.bf16.msra.mxu0 0
    %185 = vmatprep.subr.bf16.mxu0 0
    %186 = vmatpush1.bf16.msra.mxu0 0
    %187 = vmatprep.subr.bf16.mxu0 0
    %188 = vmatpush1.bf16.msra.mxu0 0
    %189 = vmatprep.subr.bf16.mxu0 0
    %190 = vmatpush1.bf16.msra.mxu0 0
    %191 = vmatprep.subr.bf16.mxu0 0
    %192 = vmatpush1.bf16.msra.mxu0 0
    %193 = vmatprep.subr.bf16.mxu0 0
    %194 = vmatpush1.bf16.msra.mxu0 0
    %195 = vmatprep.subr.bf16.mxu0 0
    %196 = vmatpush1.bf16.msra.mxu0 0
    %197 = vmatprep.subr.bf16.mxu0 0
    %198 = vmatpush1.bf16.msra.mxu0 0
    %199 = vmatprep.mubr.bf16.mxu0 0
    %200 = vmatmul.mubr.bf16.gmra.mrb[0].mxu0 %v74
    %v201 = vpop.f32.mrb[0].mxu0
    %v202 = vadd.f32 0.0, %v201
    %v203 = vpop.f32.mrb[0].mxu0
    %v204 = vpop.f32.mrb[0].mxu0
    %v205 = vadd.f32 0.0, %v204
    %v206 = vpop.f32.mrb[0].mxu0
    %207 = vmatprep.mubr.bf16.mxu0 0
    %208 = vmatmul.mubr.bf16.gmra.mrb[0].mxu0 %v75
    %v209 = vpop.f32.mrb[0].mxu0
    %v210 = vadd.f32 0.0, %v209
    %v211 = vpop.f32.mrb[0].mxu0
    %v212 = vpop.f32.mrb[0].mxu0
    %v213 = vadd.f32 0.0, %v212
    %v214 = vpop.f32.mrb[0].mxu0
    %215 = vmatprep.mubr.bf16.mxu0 0
    %216 = vmatmul.mubr.bf16.gmra.mrb[0].mxu0 %v76
    %v217 = vpop.f32.mrb[0].mxu0
    %v218 = vadd.f32 0.0, %v217
    %v219 = vpop.f32.mrb[0].mxu0
    %v220 = vpop.f32.mrb[0].mxu0
    %v221 = vadd.f32 0.0, %v220
    %v222 = vpop.f32.mrb[0].mxu0
    %223 = vmatprep.mubr.bf16.mxu0 0
    %224 = vmatmul.mubr.bf16.gmra.mrb[0].mxu0 %v77
    %v225 = vpop.f32.mrb[0].mxu0
    %v226 = vadd.f32 0.0, %v225
    %v227 = vpop.f32.mrb[0].mxu0
    %v228 = vpop.f32.mrb[0].mxu0
    %v229 = vadd.f32 0.0, %v228
    %v230 = vpop.f32.mrb[0].mxu0
    %231 = vmatprep.mubr.bf16.mxu0 0
    %232 = vmatmul.mubr.bf16.gmra.mrb[0].mxu0 %v78
    %v233 = vpop.f32.mrb[0].mxu0
    %v234 = vadd.f32 0.0, %v233
    %v235 = vpop.f32.mrb[0].mxu0
    %v236 = vpop.f32.mrb[0].mxu0
    %v237 = vadd.f32 0.0, %v236
    %v238 = vpop.f32.mrb[0].mxu0
    %239 = vmatprep.mubr.bf16.mxu0 0
    %240 = vmatmul.mubr.bf16.gmra.mrb[0].mxu0 %v79
    %v241 = vpop.f32.mrb[0].mxu0
    %v242 = vadd.f32 0.0, %v241
    %v243 = vpop.f32.mrb[0].mxu0
    %v244 = vpop.f32.mrb[0].mxu0
    %v245 = vadd.f32 0.0, %v244
    %v246 = vpop.f32.mrb[0].mxu0
    %247 = vmatprep.mubr.bf16.mxu0 0
    %248 = vmatmul.mubr.bf16.gmra.mrb[0].mxu0 %v80
    %v249 = vpop.f32.mrb[0].mxu0
    %v250 = vadd.f32 0.0, %v249
    %v251 = vpop.f32.mrb[0].mxu0
    %v252 = vpop.f32.mrb[0].mxu0
    %v253 = vadd.f32 0.0, %v252
    %v254 = vpop.f32.mrb[0].mxu0
    %255 = vmatprep.mubr.bf16.mxu0 0
    %256 = vmatmul.mubr.bf16.gmra.mrb[0].mxu0 %v81
    %v257 = vpop.f32.mrb[0].mxu0
    %v258 = vadd.f32 0.0, %v257
    %v259 = vpop.f32.mrb[0].mxu0
    %v260 = vpop.f32.mrb[0].mxu0
    %v261 = vadd.f32 0.0, %v260
    %v262 = vpop.f32.mrb[0].mxu0
    %263 = vdwg.mxu0
    %v264 = vadd.f32 %v103, %v202
    %v265 = vadd.f32 %v104, %v205
    %v266 = vadd.f32 %v105, %v210
    %v267 = vadd.f32 %v106, %v213
    %v268 = vadd.f32 %v107, %v218
    %v269 = vadd.f32 %v108, %v221
    %v270 = vadd.f32 %v109, %v226
    %v271 = vadd.f32 %v110, %v229
    %v272 = vadd.f32 %v111, %v234
    %v273 = vadd.f32 %v112, %v237
    %v274 = vadd.f32 %v113, %v242
    %v275 = vadd.f32 %v114, %v245
    %v276 = vadd.f32 %v115, %v250
    %v277 = vadd.f32 %v116, %v253
    %v278 = vadd.f32 %v117, %v258
    %v279 = vadd.f32 %v118, %v261
    %280 = vst [vmem:[#allocation7] sm:$0xff] %v264
    %281 = vst [vmem:[#allocation7 + $0x8] sm:$0xff] %v265
    %282 = vst [vmem:[#allocation7 + $0x10] sm:$0xff] %v266
    %283 = vst [vmem:[#allocation7 + $0x18] sm:$0xff] %v267
    %284 = vst [vmem:[#allocation7 + $0x20] sm:$0xff] %v268
    %285 = vst [vmem:[#allocation7 + $0x28] sm:$0xff] %v269
    %286 = vst [vmem:[#allocation7 + $0x30] sm:$0xff] %v270
    %287 = vst [vmem:[#allocation7 + $0x38] sm:$0xff] %v271
    %288 = vst [vmem:[#allocation7 + $0x40] sm:$0xff] %v272
    %289 = vst [vmem:[#allocation7 + $0x48] sm:$0xff] %v273
    %290 = vst [vmem:[#allocation7 + $0x50] sm:$0xff] %v274
    %291 = vst [vmem:[#allocation7 + $0x58] sm:$0xff] %v275
    %292 = vst [vmem:[#allocation7 + $0x60] sm:$0xff] %v276
    %293 = vst [vmem:[#allocation7 + $0x68] sm:$0xff] %v277
    %294 = vst [vmem:[#allocation7 + $0x70] sm:$0xff] %v278
    %295 = vst [vmem:[#allocation7 + $0x78] sm:$0xff] %v279
    // Predicated region
    $region34: #{tpu_custom_call.1} parent=1 // pred_check
      %p296 = pneg %p50
    $region35: #{tpu_custom_call.1} parent=1 // pred_check_branch
      %298 = sbr.rel (%p296) target = $region37
    $region36: #{tpu_custom_call.1} parent=1 // pred_region
      %v299 = vld [vmem:[%s2] sm:$0xff]
      %v300 = vld [vmem:[%s2 + $0x8] sm:$0xff]
      %v301 = vld [vmem:[%s2 + $0x10] sm:$0xff]
      %v302 = vld [vmem:[%s2 + $0x18] sm:$0xff]
      %v303 = vld [vmem:[%s2 + $0x20] sm:$0xff]
      %v304 = vld [vmem:[%s2 + $0x28] sm:$0xff]
      %v305 = vld [vmem:[%s2 + $0x30] sm:$0xff]
      %v306 = vld [vmem:[%s2 + $0x38] sm:$0xff]
      %v307 = vld [vmem:[%s2 + $0x40] sm:$0xff]
      %v308 = vld [vmem:[%s2 + $0x48] sm:$0xff]
      %v309 = vld [vmem:[%s2 + $0x50] sm:$0xff]
      %v310 = vld [vmem:[%s2 + $0x58] sm:$0xff]
      %v311 = vld [vmem:[%s2 + $0x60] sm:$0xff]
      %v312 = vld [vmem:[%s2 + $0x68] sm:$0xff]
      %v313 = vld [vmem:[%s2 + $0x70] sm:$0xff]
      %v314 = vld [vmem:[%s2 + $0x78] sm:$0xff]
      %v315 = vld [vmem:[#allocation7] sm:$0xff]
      %v316 = vld [vmem:[#allocation7 + $0x8] sm:$0xff]
      %v317 = vld [vmem:[#allocation7 + $0x10] sm:$0xff]
      %v318 = vld [vmem:[#allocation7 + $0x18] sm:$0xff]
      %v319 = vld [vmem:[#allocation7 + $0x20] sm:$0xff]
      %v320 = vld [vmem:[#allocation7 + $0x28] sm:$0xff]
      %v321 = vld [vmem:[#allocation7 + $0x30] sm:$0xff]
      %v322 = vld [vmem:[#allocation7 + $0x38] sm:$0xff]
      %v323 = vld [vmem:[#allocation7 + $0x40] sm:$0xff]
      %v324 = vld [vmem:[#allocation7 + $0x48] sm:$0xff]
      %v325 = vld [vmem:[#allocation7 + $0x50] sm:$0xff]
      %v326 = vld [vmem:[#allocation7 + $0x58] sm:$0xff]
      %v327 = vld [vmem:[#allocation7 + $0x60] sm:$0xff]
      %v328 = vld [vmem:[#allocation7 + $0x68] sm:$0xff]
      %v329 = vld [vmem:[#allocation7 + $0x70] sm:$0xff]
      %v330 = vld [vmem:[#allocation7 + $0x78] sm:$0xff]
      %332 = vset.pattern.permute.xlu0 0
      %333 = vperm.xlu0 %332, %v299
      %v334 = vpop.permute.xlu0 %333
      %337 = vset.pattern.permute.xlu0 0
      %338 = vperm.xlu0 %337, %v300
      %v339 = vpop.permute.xlu0 %338
      %342 = vset.pattern.permute.xlu0 0
      %343 = vperm.xlu0 %342, %v301
      %v344 = vpop.permute.xlu0 %343
      %347 = vset.pattern.permute.xlu0 0
      %348 = vperm.xlu0 %347, %v302
      %v349 = vpop.permute.xlu0 %348
      %352 = vset.pattern.permute.xlu0 0
      %353 = vperm.xlu0 %352, %v303
      %v354 = vpop.permute.xlu0 %353
      %357 = vset.pattern.permute.xlu0 0
      %358 = vperm.xlu0 %357, %v304
      %v359 = vpop.permute.xlu0 %358
      %362 = vset.pattern.permute.xlu0 0
      %363 = vperm.xlu0 %362, %v305
      %v364 = vpop.permute.xlu0 %363
      %367 = vset.pattern.permute.xlu0 0
      %368 = vperm.xlu0 %367, %v306
      %v369 = vpop.permute.xlu0 %368
      %372 = vset.pattern.permute.xlu0 0
      %373 = vperm.xlu0 %372, %v307
      %v374 = vpop.permute.xlu0 %373
      %377 = vset.pattern.permute.xlu0 0
      %378 = vperm.xlu0 %377, %v308
      %v379 = vpop.permute.xlu0 %378
      %382 = vset.pattern.permute.xlu0 0
      %383 = vperm.xlu0 %382, %v309
      %v384 = vpop.permute.xlu0 %383
      %387 = vset.pattern.permute.xlu0 0
      %388 = vperm.xlu0 %387, %v310
      %v389 = vpop.permute.xlu0 %388
      %392 = vset.pattern.permute.xlu0 0
      %393 = vperm.xlu0 %392, %v311
      %v394 = vpop.permute.xlu0 %393
      %397 = vset.pattern.permute.xlu0 0
      %398 = vperm.xlu0 %397, %v312
      %v399 = vpop.permute.xlu0 %398
      %402 = vset.pattern.permute.xlu0 0
      %403 = vperm.xlu0 %402, %v313
      %v404 = vpop.permute.xlu0 %403
      %407 = vset.pattern.permute.xlu0 0
      %408 = vperm.xlu0 %407, %v314
      %v409 = vpop.permute.xlu0 %408
      %v411 = vmul.f32 %v334, %v315
      %v412 = vmul.f32 %v339, %v316
      %v413 = vmul.f32 %v344, %v317
      %v414 = vmul.f32 %v349, %v318
      %v415 = vmul.f32 %v354, %v319
      %v416 = vmul.f32 %v359, %v320
      %v417 = vmul.f32 %v364, %v321
      %v418 = vmul.f32 %v369, %v322
      %v419 = vmul.f32 %v374, %v323
      %v420 = vmul.f32 %v379, %v324
      %v421 = vmul.f32 %v384, %v325
      %v422 = vmul.f32 %v389, %v326
      %v423 = vmul.f32 %v394, %v327
      %v424 = vmul.f32 %v399, %v328
      %v425 = vmul.f32 %v404, %v329
      %v426 = vmul.f32 %v409, %v330
      %v427 = vld [vmem:[%s3] sm:$0xff]
      %v428 = vld [vmem:[%s3 + $0x8] sm:$0xff]
      %v429 = vld [vmem:[%s3 + $0x10] sm:$0xff]
      %v430 = vld [vmem:[%s3 + $0x18] sm:$0xff]
      %v431 = vld [vmem:[%s3 + $0x20] sm:$0xff]
      %v432 = vld [vmem:[%s3 + $0x28] sm:$0xff]
      %v433 = vld [vmem:[%s3 + $0x30] sm:$0xff]
      %v434 = vld [vmem:[%s3 + $0x38] sm:$0xff]
      %v435 = vld [vmem:[%s3 + $0x40] sm:$0xff]
      %v436 = vld [vmem:[%s3 + $0x48] sm:$0xff]
      %v437 = vld [vmem:[%s3 + $0x50] sm:$0xff]
      %v438 = vld [vmem:[%s3 + $0x58] sm:$0xff]
      %v439 = vld [vmem:[%s3 + $0x60] sm:$0xff]
      %v440 = vld [vmem:[%s3 + $0x68] sm:$0xff]
      %v441 = vld [vmem:[%s3 + $0x70] sm:$0xff]
      %v442 = vld [vmem:[%s3 + $0x78] sm:$0xff]
      %v443 = vld [vmem:[%s4] sm:$0x1]
      %v445 = vlaneseq
      %v446 = vshrl.u32 %v445, 7
      %v447 = vsub.s32 0, %v446
      %v448 = vrot.slane %v443, %v447
      %450 = vmatprep.subr.mxu0 0.0
      %451 = vmatpush1.msra.mxu0 %v427
      %452 = vmatprep.subr.mxu0 0.0
      %453 = vmatpush1.msra.mxu0 %v428
      %454 = vmatprep.subr.mxu0 0.0
      %455 = vmatpush1.msra.mxu0 %v429
      %456 = vmatprep.subr.mxu0 0.0
      %457 = vmatpush1.msra.mxu0 %v430
      %458 = vmatprep.subr.mxu0 0.0
      %459 = vmatpush1.msra.mxu0 %v431
      %460 = vmatprep.subr.mxu0 0.0
      %461 = vmatpush1.msra.mxu0 %v432
      %462 = vmatprep.subr.mxu0 0.0
      %463 = vmatpush1.msra.mxu0 %v433
      %464 = vmatprep.subr.mxu0 0.0
      %465 = vmatpush1.msra.mxu0 %v434
      %466 = vmatprep.subr.mxu0 0.0
      %467 = vmatpush1.msra.mxu0 %v435
      %468 = vmatprep.subr.mxu0 0.0
      %469 = vmatpush1.msra.mxu0 %v436
      %470 = vmatprep.subr.mxu0 0.0
      %471 = vmatpush1.msra.mxu0 %v437
      %472 = vmatprep.subr.mxu0 0.0
      %473 = vmatpush1.msra.mxu0 %v438
      %474 = vmatprep.subr.mxu0 0.0
      %475 = vmatpush1.msra.mxu0 %v439
      %476 = vmatprep.subr.mxu0 0.0
      %477 = vmatpush1.msra.mxu0 %v440
      %478 = vmatprep.subr.mxu0 0.0
      %479 = vmatpush1.msra.mxu0 %v441
      %480 = vmatprep.subr.mxu0 0.0
      %481 = vmatpush1.msra.mxu0 %v442
      %482 = vmatprep.subr.mxu0 0.0
      %483 = vmatpush1.msra.mxu0 0.0
      %484 = vmatprep.subr.mxu0 0.0
      %485 = vmatpush1.msra.mxu0 0.0
      %486 = vmatprep.subr.mxu0 0.0
      %487 = vmatpush1.msra.mxu0 0.0
      %488 = vmatprep.subr.mxu0 0.0
      %489 = vmatpush1.msra.mxu0 0.0
      %490 = vmatprep.subr.mxu0 0.0
      %491 = vmatpush1.msra.mxu0 0.0
      %492 = vmatprep.subr.mxu0 0.0
      %493 = vmatpush1.msra.mxu0 0.0
      %494 = vmatprep.subr.mxu0 0.0
      %495 = vmatpush1.msra.mxu0 0.0
      %496 = vmatprep.subr.mxu0 0.0
      %497 = vmatpush1.msra.mxu0 0.0
      %498 = vmatprep.subr.mxu0 0.0
      %499 = vmatpush1.msra.mxu0 0.0
      %500 = vmatprep.subr.mxu0 0.0
      %501 = vmatpush1.msra.mxu0 0.0
      %502 = vmatprep.subr.mxu0 0.0
      %503 = vmatpush1.msra.mxu0 0.0
      %504 = vmatprep.subr.mxu0 0.0
      %505 = vmatpush1.msra.mxu0 0.0
      %506 = vmatprep.subr.mxu0 0.0
      %507 = vmatpush1.msra.mxu0 0.0
      %508 = vmatprep.subr.mxu0 0.0
      %509 = vmatpush1.msra.mxu0 0.0
      %510 = vmatprep.subr.mxu0 0.0
      %511 = vmatpush1.msra.mxu0 0.0
      %512 = vmatprep.subr.mxu0 0.0
      %513 = vmatpush1.msra.mxu0 0.0
      %514 = vmatprep.mubr.f32.mxu0 0.0
      %515 = vmatmul.mubr.f32.gmra.mrb[0].mxu0 %v411
      %v516 = vpop.f32.mrb[0].mxu0
      %v517 = vadd.f32 %v448, %v516
      %v518 = vpop.f32.mrb[0].mxu0
      %519 = vmatprep.mubr.f32.mxu0 0.0
      %520 = vmatmul.mubr.f32.gmra.mrb[0].mxu0 %v412
      %v521 = vpop.f32.mrb[0].mxu0
      %v522 = vadd.f32 %v448, %v521
      %v523 = vpop.f32.mrb[0].mxu0
      %524 = vmatprep.mubr.f32.mxu0 0.0
      %525 = vmatmul.mubr.f32.gmra.mrb[0].mxu0 %v413
      %v526 = vpop.f32.mrb[0].mxu0
      %v527 = vadd.f32 %v448, %v526
      %v528 = vpop.f32.mrb[0].mxu0
      %529 = vmatprep.mubr.f32.mxu0 0.0
      %530 = vmatmul.mubr.f32.gmra.mrb[0].mxu0 %v414
      %v531 = vpop.f32.mrb[0].mxu0
      %v532 = vadd.f32 %v448, %v531
      %v533 = vpop.f32.mrb[0].mxu0
      %534 = vmatprep.mubr.f32.mxu0 0.0
      %535 = vmatmul.mubr.f32.gmra.mrb[0].mxu0 %v415
      %v536 = vpop.f32.mrb[0].mxu0
      %v537 = vadd.f32 %v448, %v536
      %v538 = vpop.f32.mrb[0].mxu0
      %539 = vmatprep.mubr.f32.mxu0 0.0
      %540 = vmatmul.mubr.f32.gmra.mrb[0].mxu0 %v416
      %v541 = vpop.f32.mrb[0].mxu0
      %v542 = vadd.f32 %v448, %v541
      %v543 = vpop.f32.mrb[0].mxu0
      %544 = vmatprep.mubr.f32.mxu0 0.0
      %545 = vmatmul.mubr.f32.gmra.mrb[0].mxu0 %v417
      %v546 = vpop.f32.mrb[0].mxu0
      %v547 = vadd.f32 %v448, %v546
      %v548 = vpop.f32.mrb[0].mxu0
      %549 = vmatprep.mubr.f32.mxu0 0.0
      %550 = vmatmul.mubr.f32.gmra.mrb[0].mxu0 %v418
      %v551 = vpop.f32.mrb[0].mxu0
      %v552 = vadd.f32 %v448, %v551
      %v553 = vpop.f32.mrb[0].mxu0
      %554 = vmatprep.mubr.f32.mxu0 0.0
      %555 = vmatmul.mubr.f32.gmra.mrb[0].mxu0 %v419
      %v556 = vpop.f32.mrb[0].mxu0
      %v557 = vadd.f32 %v448, %v556
      %v558 = vpop.f32.mrb[0].mxu0
      %559 = vmatprep.mubr.f32.mxu0 0.0
      %560 = vmatmul.mubr.f32.gmra.mrb[0].mxu0 %v420
      %v561 = vpop.f32.mrb[0].mxu0
      %v562 = vadd.f32 %v448, %v561
      %v563 = vpop.f32.mrb[0].mxu0
      %564 = vmatprep.mubr.f32.mxu0 0.0
      %565 = vmatmul.mubr.f32.gmra.mrb[0].mxu0 %v421
      %v566 = vpop.f32.mrb[0].mxu0
      %v567 = vadd.f32 %v448, %v566
      %v568 = vpop.f32.mrb[0].mxu0
      %569 = vmatprep.mubr.f32.mxu0 0.0
      %570 = vmatmul.mubr.f32.gmra.mrb[0].mxu0 %v422
      %v571 = vpop.f32.mrb[0].mxu0
      %v572 = vadd.f32 %v448, %v571
      %v573 = vpop.f32.mrb[0].mxu0
      %574 = vmatprep.mubr.f32.mxu0 0.0
      %575 = vmatmul.mubr.f32.gmra.mrb[0].mxu0 %v423
      %v576 = vpop.f32.mrb[0].mxu0
      %v577 = vadd.f32 %v448, %v576
      %v578 = vpop.f32.mrb[0].mxu0
      %579 = vmatprep.mubr.f32.mxu0 0.0
      %580 = vmatmul.mubr.f32.gmra.mrb[0].mxu0 %v424
      %v581 = vpop.f32.mrb[0].mxu0
      %v582 = vadd.f32 %v448, %v581
      %v583 = vpop.f32.mrb[0].mxu0
      %584 = vmatprep.mubr.f32.mxu0 0.0
      %585 = vmatmul.mubr.f32.gmra.mrb[0].mxu0 %v425
      %v586 = vpop.f32.mrb[0].mxu0
      %v587 = vadd.f32 %v448, %v586
      %v588 = vpop.f32.mrb[0].mxu0
      %589 = vmatprep.mubr.f32.mxu0 0.0
      %590 = vmatmul.mubr.f32.gmra.mrb[0].mxu0 %v426
      %v591 = vpop.f32.mrb[0].mxu0
      %v592 = vadd.f32 %v448, %v591
      %v593 = vpop.f32.mrb[0].mxu0
      %594 = vdwg.mxu0
      %595 = vst [vmem:[#allocation7] sm:$0xff] %v517
      %596 = vst [vmem:[#allocation7 + $0x8] sm:$0xff] %v522
      %597 = vst [vmem:[#allocation7 + $0x10] sm:$0xff] %v527
      %598 = vst [vmem:[#allocation7 + $0x18] sm:$0xff] %v532
      %599 = vst [vmem:[#allocation7 + $0x20] sm:$0xff] %v537
      %600 = vst [vmem:[#allocation7 + $0x28] sm:$0xff] %v542
      %601 = vst [vmem:[#allocation7 + $0x30] sm:$0xff] %v547
      %602 = vst [vmem:[#allocation7 + $0x38] sm:$0xff] %v552
      %603 = vst [vmem:[#allocation7 + $0x40] sm:$0xff] %v557
      %604 = vst [vmem:[#allocation7 + $0x48] sm:$0xff] %v562
      %605 = vst [vmem:[#allocation7 + $0x50] sm:$0xff] %v567
      %606 = vst [vmem:[#allocation7 + $0x58] sm:$0xff] %v572
      %607 = vst [vmem:[#allocation7 + $0x60] sm:$0xff] %v577
      %608 = vst [vmem:[#allocation7 + $0x68] sm:$0xff] %v582
      %609 = vst [vmem:[#allocation7 + $0x70] sm:$0xff] %v587
      %610 = vst [vmem:[#allocation7 + $0x78] sm:$0xff] %v592
    $region37: #{tpu_custom_call.1} parent=1 // pred_fallthru
      _
    // Predicated region
    $region38: #{tpu_custom_call.1} parent=1 // pred_check
      _
    $region39: #{tpu_custom_call.1} parent=1 // pred_check_branch
      %612 = sbr.rel (0) target = $region41
    $region40: #{tpu_custom_call.1} parent=1 // pred_region
      %s614 = ssub.s32 2048, 2048
      %615 = vsyncadd [#allocation4], %s614
      %s616 = sshll.u32 [#allocation7], 4
      %s617 = int_to_ptr.vmem [resolvable:$true] %s616
      %622 = dma.vmem_to_hbm [thread:$0]  %s617, 2048, %s5, [#allocation4], 128, 128, 8
    $region41: #{tpu_custom_call.1} parent=1 // pred_fallthru
      _
    // Predicated region
    $region42: #{tpu_custom_call.1} parent=1 // pred_check
      _
    $region43: #{tpu_custom_call.1} parent=1 // pred_check_branch
      %624 = sbr.rel (0) target = $region45
    $region44: #{tpu_custom_call.1} parent=1 // pred_region
      %625 = dma.done [#allocation4], 2048
    $region45: #{tpu_custom_call.1} parent=1 // pred_fallthru
      _
    %626 = vsyncpa [#allocation3], 1
    %627 = vsyncpa [#allocation6], 1
    %628 = vsyncpa [#allocation4], 1

</llo_original>
